<compile_context>
chip_gen: v5e
topology: v5e:2x2
jax: 0.10.0
libtpu: 0.0.40
codegen_flags: <defaults>
</compile_context>

<pallas_src>
import math
from functools import partial

import numpy as np
import jax
import jax.numpy as jnp
from jax import lax
from jax.experimental import pallas as pl
from jax.experimental.pallas import tpu as pltpu

LANE = 128
VMEM_LIMIT_BYTES = 32 * 1024 * 1024


def _round_up(x, m):
    return ((x + m - 1) // m) * m


def _cdiv(a, b):
    return (a + b - 1) // b


def _choose_tiling(n_elems, max_block_rows):
    """Sublane-dense (block_rows, 128) tiling for a flat int32 slab of n_elems."""
    max_block_rows = max(_round_up(max_block_rows, 8), 8)
    rows = max(_cdiv(max(n_elems, 1), LANE), 1)
    if rows <= max_block_rows:
        block_rows = _round_up(rows, 8)
        rows_pad = block_rows
    else:
        block_rows = max_block_rows
        rows_pad = _round_up(rows, block_rows)
    return block_rows, rows_pad


def _floor_divmod_const(a, d):
    """floor divmod by a compile-time constant d, with integer guards."""
    q = jnp.floor(a.astype(jnp.float32) * np.float32(1.0 / d)).astype(jnp.int32)
    rem = a - q * d
    # integer guards against fp-rounding off-by-one
    q = jnp.where(rem >= d, q + 1, q)
    rem = jnp.where(rem >= d, rem - d, rem)
    q = jnp.where(rem < 0, q - 1, q)
    rem = jnp.where(rem < 0, rem + d, rem)
    return q, rem


# -------------------- kernel 1: window sort keys (vx, vy) --------------------
def _keys_kernel(coords_ref, vx_ref, vy_ref, *, window_shape, shift, max_nx, max_ny):
    w = window_shape
    sxy = (w // 2) if shift else 0
    b = coords_ref[0]                    # (block_rows, 128)
    y = coords_ref[1] + sxy
    x = coords_ref[2] + sxy
    max_per = max_nx * max_ny
    if (w & (w - 1)) == 0:               # power-of-two window: shift / mask
        lg = w.bit_length() - 1
        win_x, in_x = x >> lg, x & (w - 1)
        win_y, in_y = y >> lg, y & (w - 1)
        bwx = b * max_per + win_x * max_ny + win_y
        bwy = b * max_per + win_y * max_nx + win_x
        vx_ref[...] = (bwx << (2 * lg)) + (in_x << lg) + in_y
        vy_ref[...] = (bwy << (2 * lg)) + (in_y << lg) + in_x
    else:                                # generic fallback (guarded divmod)
        win_x, in_x = _floor_divmod_const(x, w)
        win_y, in_y = _floor_divmod_const(y, w)
        bwx = b * max_per + win_x * max_ny + win_y
        bwy = b * max_per + win_y * max_nx + win_x
        ww = w * w
        vx_ref[...] = bwx * ww + in_x * w + in_y
        vy_ref[...] = bwy * ww + in_y * w + in_x


# -------------------- kernel 2: fused win2flat + flat2win mapping --------------------
def _mapping_kernel(bs_ref, bsp_ref, n_ref, npb_ref, ts_ref,
                    w2f_ref, f2w_ref, *, batch_size, group_size, block_rows,
                    total, total_p, unroll_batches):
    g = group_size
    base = pl.program_id(0) * (block_rows * LANE)
    block_hi = base + block_rows * LANE
    row = lax.broadcasted_iota(jnp.int32, (block_rows, LANE), 0)
    lane = lax.broadcasted_iota(jnp.int32, (block_rows, LANE), 1)
    pos = base + row * LANE + lane

    # ---- pass 1: register-resident accumulation, single store per output ----
    #   w2f[pos] = pos + sum_i pad_i * (pos >= bs[i+1])
    #   f2w[pos] = pos - sum_i pad_i * (pos >= bsp[i+1]) - g * (multi-group tail)
    def accum_body(i, carry):
        w2f, f2w = carry
        pad_i = npb_ref[i] - n_ref[i]
        w2f = w2f + jnp.where(pos >= bs_ref[i + 1], pad_i, 0)
        f2w = f2w - jnp.where(pos >= bsp_ref[i + 1], pad_i, 0)
        # multi-group padded tail duplicates the previous group -> subtract g
        multi_corr = jnp.where((pad_i != 0) & (npb_ref[i] != g), g, 0)
        in_tail = (pos >= ts_ref[i]) & (pos < bsp_ref[i + 1])
        f2w = f2w - jnp.where(in_tail, multi_corr, 0)
        return w2f, f2w

    if unroll_batches:
        w2f, f2w = pos, pos
        for i in range(batch_size):
            w2f, f2w = accum_body(i, (w2f, f2w))
    else:
        w2f, f2w = lax.fori_loop(0, batch_size, accum_body, (pos, pos))

    # fold zeroing of the pad region into the single store
    w2f_ref[...] = jnp.where(pos < total, w2f, 0)
    f2w_ref[...] = jnp.where(pos < total_p, f2w, 0)

    # ---- pass 2: rare single-group cyclic-repeat tail (scalar-gated RMW) ----
    def tail_body(i, carry):
        lo = bs_ref[i]
        lop = bsp_ref[i]
        hip = bsp_ref[i + 1]
        ni = n_ref[i]
        npi = npb_ref[i]
        tail_start = ts_ref[i]

        @pl.when((ni != npi) & (npi == g) & (hip > base) & (tail_start < block_hi))
        def _single():
            # cyclic repeat of this batch's flat indices: bs[i] + (pos - bsp[i]) mod ni
            in_tail = (pos >= tail_start) & (pos < hip)
            d = pos - lop
            inv_ni = 1.0 / ni.astype(jnp.float32)   # hoisted per-batch scalar
            q = jnp.floor(d.astype(jnp.float32) * inv_ni).astype(jnp.int32)
            rem = d - q * ni
            # integer guards against fp-rounding off-by-one (assumes g < 2**23)
            rem = jnp.where(rem >= ni, rem - ni, rem)
            rem = jnp.where(rem < 0, rem + ni, rem)
            f2w_ref[...] = jnp.where(in_tail, lo + rem, f2w_ref[...])

        return carry

    if unroll_batches:
        for i in range(batch_size):
            tail_body(i, 0)
    else:
        lax.fori_loop(0, batch_size, tail_body, 0)


# -------------------- wrappers --------------------
def compute_window_keys(coords, batch_size, sparse_shape, window_shape, shift,
                        max_block_rows=1024):
    n = coords.shape[0]
    sparse_y, sparse_x = sparse_shape
    w = window_shape
    max_nx = int(math.ceil(sparse_x / w) + 1)
    max_ny = int(math.ceil(sparse_y / w) + 1)
    if batch_size * max_nx * max_ny * w * w >= 2 ** 31:
        # TODO(synk): split the sort key into (hi, lo) int32 pairs for huge extents.
        raise ValueError("window sort keys would overflow int32 for this config")

    block_rows, rows_pad = _choose_tiling(n, max_block_rows)
    npad = rows_pad * LANE
    # pad first, then transpose: one fused XLA copy into the channel-first slab
    coords_pad = jnp.pad(coords.astype(jnp.int32), ((0, npad - n), (0, 0)))
    coords_3d = jnp.transpose(coords_pad).reshape(3, rows_pad, LANE)

    n_elems = rows_pad * LANE
    kern = partial(_keys_kernel, window_shape=w, shift=shift,
                   max_nx=max_nx, max_ny=max_ny)
    vx, vy = pl.pallas_call(
        kern,
        out_shape=(jax.ShapeDtypeStruct((rows_pad, LANE), jnp.int32),
                   jax.ShapeDtypeStruct((rows_pad, LANE), jnp.int32)),
        grid=(rows_pad // block_rows,),
        in_specs=[pl.BlockSpec((3, block_rows, LANE), lambda i: (0, i, 0))],
        out_specs=(pl.BlockSpec((block_rows, LANE), lambda i: (i, 0)),
                   pl.BlockSpec((block_rows, LANE), lambda i: (i, 0))),
        compiler_params=pltpu.CompilerParams(
            dimension_semantics=("parallel",),
            vmem_limit_bytes=VMEM_LIMIT_BYTES),
        cost_estimate=pl.CostEstimate(flops=20 * n_elems, transcendentals=0,
                                      bytes_accessed=5 * n_elems * 4),
    )(coords_3d)
    return vx.reshape(-1)[:n], vy.reshape(-1)[:n]


def build_mappings(bs, bsp, n, npb, ts, total, total_p, batch_size, group_size,
                   max_block_rows=1024):
    block_rows, rows_pad = _choose_tiling(total_p, max_block_rows)
    n_elems = rows_pad * LANE
    unroll_batches = batch_size <= 8
    kern = partial(_mapping_kernel, batch_size=batch_size,
                   group_size=group_size, block_rows=block_rows,
                   total=total, total_p=total_p, unroll_batches=unroll_batches)
    w2f, f2w = pl.pallas_call(
        kern,
        out_shape=(jax.ShapeDtypeStruct((rows_pad, LANE), jnp.int32),
                   jax.ShapeDtypeStruct((rows_pad, LANE), jnp.int32)),
        grid_spec=pltpu.PrefetchScalarGridSpec(
            num_scalar_prefetch=5,
            grid=(rows_pad // block_rows,),
            in_specs=[],
            out_specs=(pl.BlockSpec((block_rows, LANE), lambda i, *_: (i, 0)),
                       pl.BlockSpec((block_rows, LANE), lambda i, *_: (i, 0))),
        ),
        compiler_params=pltpu.CompilerParams(
            dimension_semantics=("parallel",),
            vmem_limit_bytes=VMEM_LIMIT_BYTES),
        cost_estimate=pl.CostEstimate(flops=8 * batch_size * n_elems,
                                      transcendentals=0,
                                      bytes_accessed=2 * n_elems * 4),
    )(bs, bsp, n, npb, ts)
    return w2f.reshape(-1)[:total], f2w.reshape(-1)[:total_p]


def flattened_window_mapping(coords, batch_size, sparse_shape, *,
                             window_shape, group_size, shift,
                             max_block_rows=1024):
    coords = jnp.asarray(coords, jnp.int32)
    g = group_size

    # Dispatch the keys kernel and both argsorts FIRST: they do not depend on
    # the host-side counts, so they overlap the device->host sync below.
    vx, vy = compute_window_keys(coords, batch_size, sparse_shape,
                                 window_shape, shift,
                                 max_block_rows=max_block_rows)
    # TODO(synk): argsort has no clean Pallas TPU equivalent; done in plain JAX.
    x_idx = jnp.argsort(vx, stable=True)
    y_idx = jnp.argsort(vy, stable=True)

    # Scalar bookkeeping (torch.unique / cumsum equivalent). Output sizes are
    # dynamic, so one small host sync is unavoidable — but only batch_size
    # int32 counts cross the device->host boundary, not the full point cloud.
    counts = np.asarray(
        jax.device_get(jnp.bincount(coords[:, 0], length=batch_size)),
        dtype=np.int64)
    bs = np.concatenate([[0], np.cumsum(counts)])
    counts_p = (counts + g - 1) // g * g
    bsp = np.concatenate([[0], np.cumsum(counts_p)])
    total, total_p = int(bs[-1]), int(bsp[-1])
    ts = bsp[1:] - g + counts % g          # padded-tail start per batch

    bs_i = jnp.asarray(bs, jnp.int32)
    bsp_i = jnp.asarray(bsp, jnp.int32)
    n_i = jnp.asarray(counts, jnp.int32)
    np_i = jnp.asarray(counts_p, jnp.int32)
    ts_i = jnp.asarray(ts, jnp.int32)

    win2flat, flat2win = build_mappings(bs_i, bsp_i, n_i, np_i, ts_i,
                                        total, total_p, batch_size, g,
                                        max_block_rows=max_block_rows)

    return {'flat2win': flat2win, 'win2flat': win2flat, 'x': x_idx, 'y': y_idx}


# -------------------- numpy reference (mirrors the torch code) --------------------
def _numpy_reference(coords, batch_size, sparse_shape, window_shape, group_size, shift):
    coords = coords.astype(np.int64)
    g = group_size
    counts = np.bincount(coords[:, 0], minlength=batch_size)
    bs = np.concatenate([[0], np.cumsum(counts)])
    counts_p = (bs[1:] - bs[:-1] + g - 1) // g * g
    bsp = np.concatenate([[0], np.cumsum(counts_p)])
    flat2win = np.arange(bsp[-1])
    win2flat = np.arange(bs[-1])
    for i in range(batch_size):
        if counts[i] != counts_p[i]:
            bias = bsp[i] - bs[i]
            if bsp[i + 1] - bsp[i] - g != 0:
                flat2win[bsp[i + 1] - g + counts[i] % g:bsp[i + 1]] = \
                    flat2win[bsp[i + 1] - 2 * g + counts[i] % g:bsp[i + 1] - g]
            else:
                rep = np.tile(win2flat[bs[i]:bs[i + 1]],
                              (bsp[i + 1] - bsp[i]) // counts[i] + 1)
                flat2win[bsp[i + 1] - g + counts[i] % g:bsp[i + 1]] = \
                    rep[:g - counts[i] % g] + bias
        win2flat[bs[i]:bs[i + 1]] += bsp[i] - bs[i]
        flat2win[bsp[i]:bsp[i + 1]] -= bsp[i] - bs[i]

    sy, sx = sparse_shape
    w = window_shape
    shift_xy = (w // 2) if shift else 0
    max_nx = int(np.ceil(sx / w) + 1)
    max_ny = int(np.ceil(sy / w) + 1)
    mpw = max_nx * max_ny
    x = coords[:, 2] + shift_xy
    y = coords[:, 1] + shift_xy
    wx, wy = x // w, y // w
    ix, iy = x % w, y % w
    bwx = coords[:, 0] * mpw + wx * max_ny + wy
    bwy = coords[:, 0] * mpw + wy * max_nx + wx
    vx = bwx * w * w + ix * w + iy
    vy = bwy * w * w + iy * w + ix
    return {'flat2win': flat2win, 'win2flat': win2flat,
            'x': np.argsort(vx, kind='stable'), 'y': np.argsort(vy, kind='stable')}


if __name__ == "__main__":
    key = jax.random.PRNGKey(0)

    def run_case(k, batch_size, per_batch, sparse_shape, window_shape,
                 group_size, shift, max_block_rows=1024):
        n_total = sum(per_batch)
        b_col = np.repeat(np.arange(batch_size), per_batch).astype(np.int32)
        yx = jax.random.randint(k, (n_total, 2), 0, min(sparse_shape),
                                dtype=jnp.int32)
        coords = jnp.concatenate([jnp.asarray(b_col)[:, None], yx], axis=1)  # [b, y, x]

        out = flattened_window_mapping(coords, batch_size, sparse_shape,
                                       window_shape=window_shape,
                                       group_size=group_size, shift=shift,
                                       max_block_rows=max_block_rows)
        jax.block_until_ready(out)

        ref = _numpy_reference(np.asarray(coords), batch_size, sparse_shape,
                               window_shape, group_size, shift)
        for name in ['flat2win', 'win2flat', 'x', 'y']:
            assert np.array_equal(np.asarray(out[name]), ref[name]), \
                f"mismatch in {name}"

    k1, k2, k3, k4 = jax.random.split(key, 4)
    # single-group padded batch + multi-group padded batch, pow2 window, shift
    run_case(k1, 2, [5, 11], [16, 16], window_shape=4, group_size=8, shift=True)
    # non-power-of-two window, no shift, one unpadded + one multi-group padded batch
    run_case(k2, 2, [8, 13], [20, 20], window_shape=3, group_size=8, shift=False)
    # larger case forcing a multi-block grid (small max_block_rows)
    run_case(k3, 3, [400, 555, 545], [32, 32], window_shape=4, group_size=32,
             shift=True, max_block_rows=8)
    # many batches: exercises the lax.fori_loop (non-unrolled) batch path
    run_case(k4, 12, [3, 8, 5, 9, 1, 7, 8, 2, 6, 4, 8, 11], [16, 16],
             window_shape=4, group_size=8, shift=True)

    print("KERNEL_OK")
</pallas_src>

<mosaic_0001>
module attributes {stable_mosaic.version = 11 : i64} {
  func.func @_keys_kernel(%arg0: i32, %arg1: memref<3x8x128xi32, #tpu.memory_space<vmem>>, %arg2: memref<8x128xi32, #tpu.memory_space<vmem>>, %arg3: memref<8x128xi32, #tpu.memory_space<vmem>>) attributes {dimension_semantics = [#tpu.dimension_semantics<parallel>], iteration_bounds = array<i64: 1>, scalar_prefetch = 0 : i64, scratch_operands = 0 : i64, tpu.core_type = #tpu.core_type<tc>, window_params = [{transform_indices = @transform_0, window_bounds = array<i64: 3, 8, 128>}, {transform_indices = @transform_1, window_bounds = array<i64: 8, 128>}, {transform_indices = @transform_2, window_bounds = array<i64: 8, 128>}]} {
    %c0 = arith.constant 0 : index
    %c0_0 = arith.constant 0 : index
    %c0_1 = arith.constant 0 : index
    %0 = vector.load %arg1[%c0, %c0_0, %c0_1] : memref<3x8x128xi32, #tpu.memory_space<vmem>>, vector<1x8x128xi32>
    %1 = vector.shape_cast %0 : vector<1x8x128xi32> to vector<8x128xi32>
    %c1 = arith.constant 1 : index
    %c0_2 = arith.constant 0 : index
    %c0_3 = arith.constant 0 : index
    %2 = vector.load %arg1[%c1, %c0_2, %c0_3] : memref<3x8x128xi32, #tpu.memory_space<vmem>>, vector<1x8x128xi32>
    %3 = vector.shape_cast %2 : vector<1x8x128xi32> to vector<8x128xi32>
    %c2_i32 = arith.constant 2 : i32
    %4 = vector.broadcast %c2_i32 : i32 to vector<8x128xi32>
    %5 = arith.addi %3, %4 : vector<8x128xi32>
    %c2 = arith.constant 2 : index
    %c0_4 = arith.constant 0 : index
    %c0_5 = arith.constant 0 : index
    %6 = vector.load %arg1[%c2, %c0_4, %c0_5] : memref<3x8x128xi32, #tpu.memory_space<vmem>>, vector<1x8x128xi32>
    %7 = vector.shape_cast %6 : vector<1x8x128xi32> to vector<8x128xi32>
    %c2_i32_6 = arith.constant 2 : i32
    %8 = vector.broadcast %c2_i32_6 : i32 to vector<8x128xi32>
    %9 = arith.addi %7, %8 : vector<8x128xi32>
    %c2_i32_7 = arith.constant 2 : i32
    %10 = vector.broadcast %c2_i32_7 : i32 to vector<8x128xi32>
    %11 = arith.shrsi %9, %10 : vector<8x128xi32>
    %c3_i32 = arith.constant 3 : i32
    %12 = vector.broadcast %c3_i32 : i32 to vector<8x128xi32>
    %13 = arith.andi %9, %12 : vector<8x128xi32>
    %c2_i32_8 = arith.constant 2 : i32
    %14 = vector.broadcast %c2_i32_8 : i32 to vector<8x128xi32>
    %15 = arith.shrsi %5, %14 : vector<8x128xi32>
    %c3_i32_9 = arith.constant 3 : i32
    %16 = vector.broadcast %c3_i32_9 : i32 to vector<8x128xi32>
    %17 = arith.andi %5, %16 : vector<8x128xi32>
    %c25_i32 = arith.constant 25 : i32
    %18 = vector.broadcast %c25_i32 : i32 to vector<8x128xi32>
    %19 = arith.muli %1, %18 : vector<8x128xi32>
    %c5_i32 = arith.constant 5 : i32
    %20 = vector.broadcast %c5_i32 : i32 to vector<8x128xi32>
    %21 = arith.muli %11, %20 : vector<8x128xi32>
    %22 = arith.addi %19, %21 : vector<8x128xi32>
    %23 = arith.addi %22, %15 : vector<8x128xi32>
    %c25_i32_10 = arith.constant 25 : i32
    %24 = vector.broadcast %c25_i32_10 : i32 to vector<8x128xi32>
    %25 = arith.muli %1, %24 : vector<8x128xi32>
    %c5_i32_11 = arith.constant 5 : i32
    %26 = vector.broadcast %c5_i32_11 : i32 to vector<8x128xi32>
    %27 = arith.muli %15, %26 : vector<8x128xi32>
    %28 = arith.addi %25, %27 : vector<8x128xi32>
    %29 = arith.addi %28, %11 : vector<8x128xi32>
    %c4_i32 = arith.constant 4 : i32
    %30 = vector.broadcast %c4_i32 : i32 to vector<8x128xi32>
    %31 = arith.shli %23, %30 : vector<8x128xi32>
    %c2_i32_12 = arith.constant 2 : i32
    %32 = vector.broadcast %c2_i32_12 : i32 to vector<8x128xi32>
    %33 = arith.shli %13, %32 : vector<8x128xi32>
    %34 = arith.addi %31, %33 : vector<8x128xi32>
    %35 = arith.addi %34, %17 : vector<8x128xi32>
    %c0_13 = arith.constant 0 : index
    %c0_14 = arith.constant 0 : index
    %36 = vector.load %arg2[%c0_13, %c0_14] : memref<8x128xi32, #tpu.memory_space<vmem>>, vector<8x128xi32>
    tpu.vector_store %arg2[%c0_13, %c0_14], %35 {strides = array<i32>} : memref<8x128xi32, #tpu.memory_space<vmem>>, vector<8x128xi32>,
    %c4_i32_15 = arith.constant 4 : i32
    %37 = vector.broadcast %c4_i32_15 : i32 to vector<8x128xi32>
    %38 = arith.shli %29, %37 : vector<8x128xi32>
    %c2_i32_16 = arith.constant 2 : i32
    %39 = vector.broadcast %c2_i32_16 : i32 to vector<8x128xi32>
    %40 = arith.shli %17, %39 : vector<8x128xi32>
    %41 = arith.addi %38, %40 : vector<8x128xi32>
    %42 = arith.addi %41, %13 : vector<8x128xi32>
    %c0_17 = arith.constant 0 : index
    %c0_18 = arith.constant 0 : index
    %43 = vector.load %arg3[%c0_17, %c0_18] : memref<8x128xi32, #tpu.memory_space<vmem>>, vector<8x128xi32>
    tpu.vector_store %arg3[%c0_17, %c0_18], %42 {strides = array<i32>} : memref<8x128xi32, #tpu.memory_space<vmem>>, vector<8x128xi32>,
    return
  }
  func.func @transform_0(%arg0: i32) -> (i32, i32, i32) {
    %c0_i32 = arith.constant 0 : i32
    %c0_i32_0 = arith.constant 0 : i32
    %c0_i32_1 = arith.constant 0 : i32
    return %c0_i32, %arg0, %c0_i32_0 : i32, i32, i32
  }
  func.func @transform_1(%arg0: i32) -> (i32, i32) {
    %c0_i32 = arith.constant 0 : i32
    %c0_i32_0 = arith.constant 0 : i32
    return %arg0, %c0_i32 : i32, i32
  }
  func.func @transform_2(%arg0: i32) -> (i32, i32) {
    %c0_i32 = arith.constant 0 : i32
    %c0_i32_0 = arith.constant 0 : i32
    return %arg0, %c0_i32 : i32, i32
  }
}

</mosaic_0001>

<llo_original>
// kernel: tpu_custom_call.1
$region0: #{tpu_custom_call.1}
  #allocation0 [shape = 'u32[]', space=smem, size = 0x4, offset = 0x4, fixed_abs, tag = 'smem constant byte address 0x4 - core index']
  #allocation1 [shape = 'u32[72,128]{1,0:T(1,128)}', space=vmem, size = 0x9000, scoped, tag = 'internal scratch']
  %s0 = inlined_call_operand.hbm [shape: s32[3,8,128], index: 0, kind: input, shape index: {}]
  %s1 = inlined_call_operand.hbm [shape: s32[8,128], index: 1, kind: output, shape index: {0}]
  %s2 = inlined_call_operand.hbm [shape: s32[8,128], index: 2, kind: output, shape index: {1}]
  %3 = xla_tuple %s1, %s2
  %s4 = sld [smem:[#allocation0]]
  $region26: #{tpu_custom_call.1} parent=0
    _
  %s6 = ssub.s32 1, %s4
  %s7 = scalar_select 0, %s6, %s4
  $region1: #{tpu_custom_call.1} parent=0
    #allocation2 [shape = 'u8[12288]{0}', space=vmem, size = 0x3000, scoped, tag = 'input window, operand 0, single buffered']
    #allocation3 [shape = 's32[1]{0}', space=sflag, size = 0x4, scoped, tag = 'scoped memory for tpu_custom_call.1']
    #allocation4 [shape = 's32[1]{0}', space=sflag, size = 0x4, scoped, tag = 'scoped memory for tpu_custom_call.1']
    #allocation5 [shape = 'u8[4096]{0}', space=vmem, size = 0x1000, scoped, tag = 'output window, operand 0, single buffered']
    #allocation6 [shape = 'u8[4096]{0}', space=vmem, size = 0x1000, scoped, tag = 'output window, operand 1, single buffered']
    #allocation7 [shape = 's32[1]{0}', space=sflag, size = 0x4, scoped, tag = 'scoped memory for tpu_custom_call.1']
    %8 = vsyncpa [#allocation3], 0
    %9 = vsyncpa [#allocation4], 0
    %10 = vsyncpa [#allocation7], 0
    // Predicated region
    $region2: #{tpu_custom_call.1} parent=1 // pred_check
      _
    $region3: #{tpu_custom_call.1} parent=1 // pred_check_branch
      %12 = sbr.rel (0) target = $region5
    $region4: #{tpu_custom_call.1} parent=1 // pred_region
      %14 = vsyncadd [#allocation3], 0
      %s15 = sshll.u32 %s0, 4
      %s16 = int_to_ptr.hbm [resolvable:$true] %s15
      %s17 = sshll.u32 [#allocation2], 4
      %s18 = int_to_ptr.vmem [resolvable:$true] %s17
      %23 = dma.hbm_to_vmem [thread:$0]  %s16, 384, %s18, [#allocation3], 128, 128, 8
    $region5: #{tpu_custom_call.1} parent=1 // pred_fallthru
      _
    // Predicated region
    $region6: #{tpu_custom_call.1} parent=1 // pred_check
      _
    $region7: #{tpu_custom_call.1} parent=1 // pred_check_branch
      %25 = sbr.rel (0) target = $region9
    $region8: #{tpu_custom_call.1} parent=1 // pred_region
      %27 = dma.done [#allocation3], 384
    $region9: #{tpu_custom_call.1} parent=1 // pred_fallthru
      _
    %v28 = vld [vmem:[#allocation2] sm:$0xff]
    %s29 = scalar_lea.vmem [#allocation2], 8
    %v30 = vld [vmem:[%s29] sm:$0xff]
    %v31 = vadd.s32 %v30, 2
    %s32 = scalar_lea.vmem [#allocation2], 16
    %v33 = vld [vmem:[%s32] sm:$0xff]
    %v34 = vadd.s32 %v33, 2
    %v35 = vshra.s32 %v34, 2
    %v36 = vand.u32 %v34, 3
    %v37 = vshra.s32 %v31, 2
    %v38 = vand.u32 %v31, 3
    %v39 = vmul.u32 %v28, 25
    %v40 = vmul.u32 %v35, 5
    %v41 = vadd.s32 %v39, %v40
    %v42 = vadd.s32 %v41, %v37
    %v43 = vmul.u32 %v37, 5
    %v44 = vadd.s32 %v39, %v43
    %v45 = vadd.s32 %v44, %v35
    %v46 = vshll.u32 %v42, 4
    %v47 = vshll.u32 %v36, 2
    %v48 = vadd.s32 %v46, %v47
    %v49 = vadd.s32 %v48, %v38
    %50 = vst [vmem:[#allocation5] sm:$0xff] %v49
    %v51 = vshll.u32 %v45, 4
    %v52 = vshll.u32 %v38, 2
    %v53 = vadd.s32 %v51, %v52
    %v54 = vadd.s32 %v53, %v36
    %55 = vst [vmem:[#allocation6] sm:$0xff] %v54
    // Predicated region
    $region10: #{tpu_custom_call.1} parent=1 // pred_check
      _
    $region11: #{tpu_custom_call.1} parent=1 // pred_check_branch
      %57 = sbr.rel (0) target = $region13
    $region12: #{tpu_custom_call.1} parent=1 // pred_region
      %59 = vsyncadd [#allocation4], 0
      %s61 = sshll.u32 [#allocation5], 4
      %s62 = int_to_ptr.vmem [resolvable:$true] %s61
      %s63 = sshll.u32 %s1, 4
      %s64 = int_to_ptr.hbm [resolvable:$true] %s63
      %66 = dma.vmem_to_hbm [thread:$0]  %s62, 128, %s64, [#allocation4]
    $region13: #{tpu_custom_call.1} parent=1 // pred_fallthru
      _
    // Predicated region
    $region14: #{tpu_custom_call.1} parent=1 // pred_check
      _
    $region15: #{tpu_custom_call.1} parent=1 // pred_check_branch
      %68 = sbr.rel (0) target = $region17
    $region16: #{tpu_custom_call.1} parent=1 // pred_region
      %70 = vsyncadd [#allocation7], 0
      %s72 = sshll.u32 [#allocation6], 4
      %s73 = int_to_ptr.vmem [resolvable:$true] %s72
      %s74 = sshll.u32 %s2, 4
      %s75 = int_to_ptr.hbm [resolvable:$true] %s74
      %77 = dma.vmem_to_hbm [thread:$0]  %s73, 128, %s75, [#allocation7]
    $region17: #{tpu_custom_call.1} parent=1 // pred_fallthru
      _
    // Predicated region
    $region18: #{tpu_custom_call.1} parent=1 // pred_check
      _
    $region19: #{tpu_custom_call.1} parent=1 // pred_check_branch
      %79 = sbr.rel (0) target = $region21
    $region20: #{tpu_custom_call.1} parent=1 // pred_region
      %81 = dma.done [#allocation4], 128
    $region21: #{tpu_custom_call.1} parent=1 // pred_fallthru
      _
    // Predicated region
    $region22: #{tpu_custom_call.1} parent=1 // pred_check
      _
    $region23: #{tpu_custom_call.1} parent=1 // pred_check_branch
      %83 = sbr.rel (0) target = $region25
    $region24: #{tpu_custom_call.1} parent=1 // pred_region
      %85 = dma.done [#allocation7], 128
    $region25: #{tpu_custom_call.1} parent=1 // pred_fallthru
      _
    %86 = vsyncpa [#allocation3], 1
    %87 = vsyncpa [#allocation4], 1
    %88 = vsyncpa [#allocation7], 1

</llo_original>
